<compile_context>
chip_gen: v7x
topology: tpu7x:2x2x1
jax: 0.10.0
libtpu: 0.0.40
codegen_flags: <defaults>
</compile_context>

<pallas_src>
import functools

import jax
import jax.numpy as jnp
from jax import lax
from jax.experimental import pallas as pl
from jax.experimental.pallas import tpu as pltpu


# ----------------------------------------------------------------------------
# Helpers: tile selection & VMEM budgeting
# ----------------------------------------------------------------------------
def _sublane_align(dtype):
    """Sublane alignment follows dtype packing: 8 for 32-bit, 16 for bf16, 32 for int8/fp8."""
    return max(8, 32 // jnp.dtype(dtype).itemsize)


def _pick_tile(dim, cap, align):
    """Largest tile <= cap that evenly divides `dim` and is `align`-aligned.

    Falls back to the full dim (block == array extent), which always satisfies the TPU
    (8, 128) block-shape rule and simply disables tiling along that axis.
    # TODO(synk): for large dims with no aligned divisor this fallback can blow VMEM;
    # pad the array (or emit a masked tail tile) instead of going untiled.
    """
    if dim <= cap:
        return dim
    t = (cap // align) * align
    while t >= align:
        if dim % t == 0:
            return t
        t -= align
    return dim


def _ceil_to(x, m):
    return -(-x // m) * m


def _vmem_block_bytes(shape, dtype):
    """VMEM footprint of one block, with (8, 128) padding of the two minor dims."""
    s = list(shape)
    if len(s) >= 1:
        s[-1] = _ceil_to(s[-1], 128)
    if len(s) >= 2:
        s[-2] = _ceil_to(s[-2], 8)
    n = 1
    for d in s:
        n *= int(d)
    return n * jnp.dtype(dtype).itemsize


def _vmem_limit_bytes(pipeline_bytes, scratch_bytes):
    """Explicit scoped-VMEM request: double-buffered pipeline blocks + persistent scratch
    with 25% headroom; floored at the 32 MiB default, clamped to v7x's 64 MiB physical."""
    est = int(1.25 * (2 * pipeline_bytes + scratch_bytes)) + (2 << 20)
    return max(32 << 20, min(est, 64 << 20))


# ----------------------------------------------------------------------------
# Tiled linear: out = x @ W^T + b   (x: (R, In), W: (Out, In), b: (Out,))
# ----------------------------------------------------------------------------
def _linear_kernel(x_ref, w_ref, b_ref, o_ref, acc_ref):
    # x_ref: (tm, tk), w_ref: (tn, tk) [W kept as (Out, In)], b_ref: (1, tn).
    @pl.when(pl.program_id(2) == 0)
    def _():
        acc_ref[...] = jnp.zeros_like(acc_ref)

    # Feed the MXU bf16 (all generations are natively bf16); accumulate in f32.
    acc_ref[...] += lax.dot_general(
        x_ref[...].astype(jnp.bfloat16),
        w_ref[...].astype(jnp.bfloat16),
        dimension_numbers=(((1,), (1,)), ((), ())),   # contract In x In: MXU eats W^T natively
        preferred_element_type=jnp.float32,
    )

    @pl.when(pl.program_id(2) == pl.num_programs(2) - 1)
    def _():
        o_ref[...] = (acc_ref[...] + b_ref[...]).astype(o_ref.dtype)


def pallas_linear(x, w, b, *, tm_cap=512, tn_cap=512, tk_cap=1024):
    """x: (R, In), w: (Out, In), b: (Out,) -> (R, Out)."""
    R, In = x.shape
    Out = w.shape[0]
    tm = _pick_tile(R, tm_cap, _sublane_align(x.dtype))
    tn = _pick_tile(Out, tn_cap, 128)   # lane dim of output / sublane dim of W block
    tk = _pick_tile(In, tk_cap, 128)    # lane dim of both operand blocks
    b2 = b.reshape(1, Out)

    pipeline = (_vmem_block_bytes((tm, tk), x.dtype)
                + _vmem_block_bytes((tn, tk), w.dtype)
                + _vmem_block_bytes((1, tn), b2.dtype)
                + _vmem_block_bytes((tm, tn), x.dtype))
    scratch = _vmem_block_bytes((tm, tn), jnp.float32)

    return pl.pallas_call(
        _linear_kernel,
        out_shape=jax.ShapeDtypeStruct((R, Out), x.dtype),
        grid=(R // tm, Out // tn, In // tk),
        in_specs=[
            pl.BlockSpec((tm, tk), lambda i, j, k: (i, k)),
            pl.BlockSpec((tn, tk), lambda i, j, k: (j, k)),
            pl.BlockSpec((1, tn), lambda i, j, k: (0, j)),
        ],
        out_specs=pl.BlockSpec((tm, tn), lambda i, j, k: (i, j)),
        scratch_shapes=[pltpu.VMEM((tm, tn), jnp.float32)],
        compiler_params=pltpu.CompilerParams(
            dimension_semantics=("parallel", "parallel", "arbitrary"),
            vmem_limit_bytes=_vmem_limit_bytes(pipeline, scratch),
        ),
    )(x, w, b2)


# ----------------------------------------------------------------------------
# Flash-style attention, transpose-free layout.
#   Q view: (B, N, H, dqk), K view: (B, M, H, dqk), V view: (B, M, H, dv)
#   Out:    (B, N, H, dv)   (a free reshape away from the lane-dense (B, N, H*dv))
# Grid: (B, N//tq, M//tkv); KV reduction axis last; online softmax in VMEM scratch.
# Heads are split inside the kernel (static per-head loop) instead of materializing a
# (B, H, S, d) transposed copy in HBM.
# ----------------------------------------------------------------------------
def _attn_kernel(q_ref, k_ref, v_ref, o_ref, m_sc, l_sc, acc_sc, *, scale, num_heads):
    # q_ref: (tq, H, dqk), k_ref: (tkv, H, dqk), v_ref: (tkv, H, dv), o_ref: (tq, H, dv)
    # m_sc, l_sc: (tq, H) f32; acc_sc: (H, tq, dv) f32.
    kv = pl.program_id(2)

    @pl.when(kv == 0)
    def _():
        m_sc[...] = jnp.full_like(m_sc, -jnp.inf)
        l_sc[...] = jnp.zeros_like(l_sc)
        acc_sc[...] = jnp.zeros_like(acc_sc)

    for h in range(num_heads):
        # Fold the softmax scale into Q once (dqk << tkv), then feed the MXU bf16.
        q_h = (q_ref[:, h, :] * scale).astype(jnp.bfloat16)            # (tq, dqk)
        k_h = k_ref[:, h, :].astype(jnp.bfloat16)                      # (tkv, dqk)
        s = lax.dot_general(
            q_h, k_h,
            dimension_numbers=(((1,), (1,)), ((), ())),                # Q @ K^T, no copy
            preferred_element_type=jnp.float32)                        # (tq, tkv) f32

        m_prev = m_sc[:, h:h + 1]                                      # (tq, 1)
        m_new = jnp.maximum(m_prev, jnp.max(s, axis=-1, keepdims=True))
        alpha = jnp.exp(m_prev - m_new)
        p = jnp.exp(s - m_new)                                         # (tq, tkv) f32
        l_sc[:, h:h + 1] = alpha * l_sc[:, h:h + 1] + jnp.sum(p, axis=-1, keepdims=True)

        v_h = v_ref[:, h, :].astype(jnp.bfloat16)                      # (tkv, dv)
        acc_sc[h] = alpha * acc_sc[h] + jnp.dot(
            p.astype(jnp.bfloat16), v_h, preferred_element_type=jnp.float32)
        m_sc[:, h:h + 1] = m_new

    @pl.when(kv == pl.num_programs(2) - 1)
    def _():
        for h in range(num_heads):
            inv_l = pl.reciprocal(l_sc[:, h:h + 1], approx=True)       # EUP, off the VALU slot
            o_ref[:, h, :] = (acc_sc[h] * inv_l).astype(o_ref.dtype)


def pallas_attention(q, k, v, scale, num_heads, *, q_cap=256, kv_cap=512):
    # q: (B, N, H, dqk), k: (B, M, H, dqk), v: (B, M, H, dv)  ->  (B, N, H, dv)
    B, N, H, dqk = q.shape
    M = k.shape[1]
    dv = v.shape[3]
    tq = _pick_tile(N, q_cap, _sublane_align(q.dtype))     # query tile (bounds scratch)
    tkv = _pick_tile(M, kv_cap, _sublane_align(k.dtype))   # KV reduction tile

    kernel = functools.partial(_attn_kernel, scale=scale, num_heads=num_heads)

    pipeline = (_vmem_block_bytes((tq, H, dqk), q.dtype)
                + _vmem_block_bytes((tkv, H, dqk), k.dtype)
                + _vmem_block_bytes((tkv, H, dv), v.dtype)
                + _vmem_block_bytes((tq, H, dv), q.dtype))
    scratch = (_vmem_block_bytes((H, tq, dv), jnp.float32)
               + 2 * _vmem_block_bytes((tq, H), jnp.float32))

    # TODO(synk): if the per-step compute shrinks enough to expose DMA (tiny tkv),
    # sweep pipeline_mode=pl.Buffered(3) on the K/V specs.
    return pl.pallas_call(
        kernel,
        out_shape=jax.ShapeDtypeStruct((B, N, H, dv), q.dtype),
        grid=(B, N // tq, M // tkv),
        in_specs=[
            pl.BlockSpec((None, tq, H, dqk), lambda b, qi, kv: (b, qi, 0, 0)),
            pl.BlockSpec((None, tkv, H, dqk), lambda b, qi, kv: (b, kv, 0, 0)),
            pl.BlockSpec((None, tkv, H, dv), lambda b, qi, kv: (b, kv, 0, 0)),
        ],
        out_specs=pl.BlockSpec((None, tq, H, dv), lambda b, qi, kv: (b, qi, 0, 0)),
        scratch_shapes=[
            pltpu.VMEM((tq, H), jnp.float32),       # running max m (compact, per q-tile)
            pltpu.VMEM((tq, H), jnp.float32),       # running denom l
            pltpu.VMEM((H, tq, dv), jnp.float32),   # running numerator acc
        ],
        compiler_params=pltpu.CompilerParams(
            dimension_semantics=("parallel", "parallel", "arbitrary"),
            vmem_limit_bytes=_vmem_limit_bytes(pipeline, scratch),
        ),
    )(q, k, v)


# ----------------------------------------------------------------------------
# Full module forward (no wrapper-side transposes, no extra HBM round trips)
# ----------------------------------------------------------------------------
def multi_head_attention_forward(params, inputs_kv, inputs_q, num_heads, *,
                                 q_tile_cap=256, kv_tile_cap=512):
    B, M, kv_dim = inputs_kv.shape
    _, N, q_dim = inputs_q.shape
    qk_out_dim = params["wq"].shape[0]
    v_out_dim = params["wv"].shape[0]
    dqk = qk_out_dim // num_heads
    dv = v_out_dim // num_heads
    scale = dqk ** (-0.5)

    # Separate Q/K/V GEMMs.  (The previous fused K+V GEMM would now require slicing its
    # output back into K and V — a full extra HBM round trip — since the head transpose
    # that used to absorb that copy is gone; re-reading inputs_kv once is cheaper.)
    x_kv = inputs_kv.reshape(B * M, kv_dim)
    q = pallas_linear(inputs_q.reshape(B * N, q_dim), params["wq"], params["bq"])
    k = pallas_linear(x_kv, params["wk"], params["bk"])
    v = pallas_linear(x_kv, params["wv"], params["bv"])

    # transform_for_scores is now a free view: (B, S, H*d) -> (B, S, H, d); heads are
    # split inside the attention kernel, so no (B, H, S, d) copy is ever materialized.
    q = q.reshape(B, N, num_heads, dqk)
    k = k.reshape(B, M, num_heads, dqk)
    v = v.reshape(B, M, num_heads, dv)

    # TODO(synk): attention_mask path not wired (matches forward(..., attention_mask=None));
    # dropout p=0.0 is the identity.
    weighted = pallas_attention(q, k, v, scale, num_heads,
                                q_cap=q_tile_cap, kv_cap=kv_tile_cap)   # (B, N, H, dv)

    # Lane-dense merge of heads is a free reshape; feed the output projection directly.
    out = pallas_linear(weighted.reshape(B * N, num_heads * dv), params["wo"], params["bo"])
    return out.reshape(B, N, params["wo"].shape[0])


# ----------------------------------------------------------------------------
# Pure-JAX f32 reference (correctness check)
# ----------------------------------------------------------------------------
def reference_forward(params, inputs_kv, inputs_q, num_heads):
    B, M, _ = inputs_kv.shape
    _, N, _ = inputs_q.shape
    qk_out_dim = params["wk"].shape[0]
    v_out_dim = params["wv"].shape[0]
    dqk = qk_out_dim // num_heads
    dv = v_out_dim // num_heads
    scale = dqk ** (-0.5)
    k = inputs_kv @ params["wk"].T + params["bk"]
    q = inputs_q @ params["wq"].T + params["bq"]
    v = inputs_kv @ params["wv"].T + params["bv"]
    k = k.reshape(B, M, num_heads, dqk).transpose(0, 2, 1, 3)
    q = q.reshape(B, N, num_heads, dqk).transpose(0, 2, 1, 3)
    v = v.reshape(B, M, num_heads, dv).transpose(0, 2, 1, 3)
    att = jnp.einsum("bhnd,bhmd->bhnm", q, k) * scale
    att = jax.nn.softmax(att, axis=-1)
    w = jnp.einsum("bhnm,bhmd->bhnd", att, v)
    w = w.transpose(0, 2, 1, 3).reshape(B, N, num_heads * dv)
    return w @ params["wo"].T + params["bo"]


if __name__ == "__main__":
    # Small shapes consistent with the module defaults:
    # B=2, M=N=16, kv_dim=q_dim=64, qk_out=v_out=output=64, num_heads=4 (head_dim=16).
    B, M, N = 2, 16, 16
    kv_dim, q_dim = 64, 64
    qk_out_dim = q_dim
    v_out_dim = qk_out_dim
    output_dim = v_out_dim
    num_heads = 4

    key = jax.random.PRNGKey(0)
    ks = jax.random.split(key, 10)

    def init_linear(kw, kb, out_dim, in_dim):
        bound = 1.0 / (in_dim ** 0.5)   # deterministic, nn.Linear-like uniform init
        w = jax.random.uniform(kw, (out_dim, in_dim), jnp.float32, -bound, bound)
        b = jax.random.uniform(kb, (out_dim,), jnp.float32, -bound, bound)
        return w, b

    wk, bk = init_linear(ks[0], ks[1], qk_out_dim, kv_dim)
    wq, bq = init_linear(ks[2], ks[3], qk_out_dim, q_dim)
    wv, bv = init_linear(ks[4], ks[5], v_out_dim, kv_dim)
    wo, bo = init_linear(ks[6], ks[7], output_dim, v_out_dim)
    params = dict(wk=wk, bk=bk, wq=wq, bq=bq, wv=wv, bv=bv, wo=wo, bo=bo)

    inputs_kv = jax.random.normal(ks[8], (B, M, kv_dim), jnp.float32)
    inputs_q = jax.random.normal(ks[9], (B, N, q_dim), jnp.float32)

    # Small tile caps so the test exercises multiple q-tiles and multiple KV reduction
    # steps (online softmax across kv grid iterations): grid = (2, 2, 2).
    out = multi_head_attention_forward(params, inputs_kv, inputs_q, num_heads,
                                       q_tile_cap=8, kv_tile_cap=8)
    out = jax.block_until_ready(out)

    ref = reference_forward(params, inputs_kv, inputs_q, num_heads)
    assert out.shape == (B, N, output_dim)
    # bf16 MXU operands + EUP approx reciprocal vs an f32 reference -> loosened tolerance.
    assert jnp.allclose(out, ref, atol=5e-2, rtol=5e-2), "mismatch vs reference"

    print("KERNEL_OK")
</pallas_src>

<mosaic_0001>
module attributes {stable_mosaic.version = 11 : i64} {
  func.func @_linear_kernel(%arg0: i32, %arg1: i32, %arg2: i32, %arg3: memref<32x64xf32, #tpu.memory_space<vmem>>, %arg4: memref<64x64xf32, #tpu.memory_space<vmem>>, %arg5: memref<1x64xf32, #tpu.memory_space<vmem>>, %arg6: memref<32x64xf32, #tpu.memory_space<vmem>>, %arg7: memref<32x64xf32, #tpu.memory_space<vmem>>) attributes {dimension_semantics = [#tpu.dimension_semantics<parallel>, #tpu.dimension_semantics<parallel>, #tpu.dimension_semantics<arbitrary>], iteration_bounds = array<i64: 1, 1, 1>, scalar_prefetch = 0 : i64, scratch_operands = 1 : i64, tpu.core_type = #tpu.core_type<tc>, window_params = [{transform_indices = @transform_0, window_bounds = array<i64: 32, 64>}, {transform_indices = @transform_1, window_bounds = array<i64: 64, 64>}, {transform_indices = @transform_2, window_bounds = array<i64: 1, 64>}, {transform_indices = @transform_3, window_bounds = array<i64: 32, 64>}]} {
    %c0_i32 = arith.constant 0 : i32
    %0 = arith.cmpi eq, %arg2, %c0_i32 : i32
    %1 = arith.extui %0 : i1 to i32
    %c0_i32_0 = arith.constant 0 : i32
    %2 = arith.cmpi ne, %1, %c0_i32_0 : i32
    scf.if %2 {
      %cst_10 = arith.constant 0.000000e+00 : f32
      %14 = vector.broadcast %cst_10 : f32 to vector<32x64xf32>
      %c0_11 = arith.constant 0 : index
      %c0_12 = arith.constant 0 : index
      %15 = vector.load %arg7[%c0_11, %c0_12] : memref<32x64xf32, #tpu.memory_space<vmem>>, vector<32x64xf32>
      tpu.vector_store %arg7[%c0_11, %c0_12], %14 {strides = array<i32>} : memref<32x64xf32, #tpu.memory_space<vmem>>, vector<32x64xf32>,
    } else {
    }
    %c0 = arith.constant 0 : index
    %c0_1 = arith.constant 0 : index
    %3 = vector.load %arg7[%c0, %c0_1] : memref<32x64xf32, #tpu.memory_space<vmem>>, vector<32x64xf32>
    %c0_2 = arith.constant 0 : index
    %c0_3 = arith.constant 0 : index
    %4 = vector.load %arg3[%c0_2, %c0_3] : memref<32x64xf32, #tpu.memory_space<vmem>>, vector<32x64xf32>
    %5 = arith.truncf %4 : vector<32x64xf32> to vector<32x64xbf16>
    %c0_4 = arith.constant 0 : index
    %c0_5 = arith.constant 0 : index
    %6 = vector.load %arg4[%c0_4, %c0_5] : memref<64x64xf32, #tpu.memory_space<vmem>>, vector<64x64xf32>
    %7 = arith.truncf %6 : vector<64x64xf32> to vector<64x64xbf16>
    %cst = arith.constant dense<0.000000e+00> : vector<32x64xf32>
    %8 = tpu.matmul %5, %7, %cst {dimension_numbers = #tpu.dot_dimension_numbers<[1], [1], [0], [0], [0, 0, 1, 0], [], []>} : vector<32x64xbf16>, vector<64x64xbf16>, vector<32x64xf32> -> vector<32x64xf32>
    %9 = arith.addf %3, %8 : vector<32x64xf32>
    %c0_6 = arith.constant 0 : index
    %c0_7 = arith.constant 0 : index
    %10 = vector.load %arg7[%c0_6, %c0_7] : memref<32x64xf32, #tpu.memory_space<vmem>>, vector<32x64xf32>
    tpu.vector_store %arg7[%c0_6, %c0_7], %9 {strides = array<i32>} : memref<32x64xf32, #tpu.memory_space<vmem>>, vector<32x64xf32>,
    %c0_i32_8 = arith.constant 0 : i32
    %11 = arith.cmpi eq, %arg2, %c0_i32_8 : i32
    %12 = arith.extui %11 : i1 to i32
    %c0_i32_9 = arith.constant 0 : i32
    %13 = arith.cmpi ne, %12, %c0_i32_9 : i32
    scf.if %13 {
      %c0_10 = arith.constant 0 : index
      %c0_11 = arith.constant 0 : index
      %14 = vector.load %arg7[%c0_10, %c0_11] : memref<32x64xf32, #tpu.memory_space<vmem>>, vector<32x64xf32>
      %c0_12 = arith.constant 0 : index
      %c0_13 = arith.constant 0 : index
      %15 = vector.load %arg5[%c0_12, %c0_13] : memref<1x64xf32, #tpu.memory_space<vmem>>, vector<1x64xf32>
      %16 = vector.broadcast %15 : vector<1x64xf32> to vector<32x64xf32>
      %17 = arith.addf %14, %16 : vector<32x64xf32>
      %c0_14 = arith.constant 0 : index
      %c0_15 = arith.constant 0 : index
      %18 = vector.load %arg6[%c0_14, %c0_15] : memref<32x64xf32, #tpu.memory_space<vmem>>, vector<32x64xf32>
      tpu.vector_store %arg6[%c0_14, %c0_15], %17 {strides = array<i32>} : memref<32x64xf32, #tpu.memory_space<vmem>>, vector<32x64xf32>,
    } else {
    }
    return
  }
  func.func @transform_0(%arg0: i32, %arg1: i32, %arg2: i32) -> (i32, i32) {
    %c0_i32 = arith.constant 0 : i32
    return %arg0, %arg2 : i32, i32
  }
  func.func @transform_1(%arg0: i32, %arg1: i32, %arg2: i32) -> (i32, i32) {
    %c0_i32 = arith.constant 0 : i32
    return %arg1, %arg2 : i32, i32
  }
  func.func @transform_2(%arg0: i32, %arg1: i32, %arg2: i32) -> (i32, i32) {
    %c0_i32 = arith.constant 0 : i32
    %c0_i32_0 = arith.constant 0 : i32
    return %c0_i32, %arg1 : i32, i32
  }
  func.func @transform_3(%arg0: i32, %arg1: i32, %arg2: i32) -> (i32, i32) {
    %c0_i32 = arith.constant 0 : i32
    return %arg0, %arg1 : i32, i32
  }
}

</mosaic_0001>

<llo_original>
// kernel: tpu_custom_call.1
$region0: #{tpu_custom_call.1}
  #allocation0 [shape = 'u32[]', space=smem, size = 0x4, offset = 0x4, fixed_abs, tag = 'smem constant byte address 0x4 - core index']
  #allocation1 [shape = 'u32[144,128]{1,0:T(1,128)}', space=vmem, size = 0x12000, scoped, tag = 'internal scratch']
  #allocation2 [shape = 'f32[32,64]{1,0:T(8,128)}', space=vmem, size = 0x4000, scoped, tag = 'scratch operand']
  %s0 = inlined_call_operand.hbm [shape: f32[32,64], index: 0, kind: input, shape index: {}]
  %s1 = inlined_call_operand.hbm [shape: f32[64,64], index: 1, kind: input, shape index: {}]
  %s2 = inlined_call_operand.vmem [shape: f32[1,64], index: 2, kind: input, shape index: {}]
  %s3 = inlined_call_operand.hbm [shape: f32[32,64], index: 3, kind: output, shape index: {}]
  %s4 = sld [smem:[#allocation0]]
  $region38: #{tpu_custom_call.1} parent=0
    _
  %s6 = ssub.s32 1, %s4
  %s7 = scalar_select 0, %s6, %s4
  $region1: #{tpu_custom_call.1} parent=0
    #allocation3 [shape = 'u8[16384]{0}', space=vmem, size = 0x4000, scoped, tag = 'input window, operand 0, single buffered']
    #allocation4 [shape = 's32[1]{0}', space=sflag, size = 0x4, scoped, tag = 'scoped memory for tpu_custom_call.1']
    #allocation5 [shape = 's32[1]{0}', space=sflag, size = 0x4, scoped, tag = 'scoped memory for tpu_custom_call.1']
    #allocation6 [shape = 'u8[32768]{0}', space=vmem, size = 0x8000, scoped, tag = 'input window, operand 1, single buffered']
    #allocation7 [shape = 's32[1]{0}', space=sflag, size = 0x4, scoped, tag = 'scoped memory for tpu_custom_call.1']
    #allocation8 [shape = 'u8[16384]{0}', space=vmem, size = 0x4000, scoped, tag = 'output window, operand 0, single buffered']
    %8 = vsyncpa [#allocation4], 0
    %9 = vsyncpa [#allocation7], 0
    %10 = vsyncpa [#allocation5], 0
    // Predicated region
    $region2: #{tpu_custom_call.1} parent=1 // pred_check
      _
    $region3: #{tpu_custom_call.1} parent=1 // pred_check_branch
      %12 = sbr.rel (0) target = $region5
    $region4: #{tpu_custom_call.1} parent=1 // pred_region
      %s14 = ssub.s32 512, 512
      %15 = vsyncadd [#allocation4], %s14
      %s16 = sshll.u32 [#allocation3], 4
      %s17 = int_to_ptr.vmem [resolvable:$true] %s16
      %22 = dma.hbm_to_vmem [thread:$0]  %s0, 512, %s17, [#allocation4], 128, 128, 8
    $region5: #{tpu_custom_call.1} parent=1 // pred_fallthru
      _
    // Predicated region
    $region6: #{tpu_custom_call.1} parent=1 // pred_check
      _
    $region7: #{tpu_custom_call.1} parent=1 // pred_check_branch
      %24 = sbr.rel (0) target = $region9
    $region8: #{tpu_custom_call.1} parent=1 // pred_region
      %s26 = ssub.s32 1024, 1024
      %27 = vsyncadd [#allocation7], %s26
      %s28 = sshll.u32 [#allocation6], 4
      %s29 = int_to_ptr.vmem [resolvable:$true] %s28
      %34 = dma.hbm_to_vmem [thread:$0]  %s1, 1024, %s29, [#allocation7], 128, 128, 8
    $region9: #{tpu_custom_call.1} parent=1 // pred_fallthru
      _
    // Predicated region
    $region10: #{tpu_custom_call.1} parent=1 // pred_check
      _
    $region11: #{tpu_custom_call.1} parent=1 // pred_check_branch
      %36 = sbr.rel (0) target = $region13
    $region12: #{tpu_custom_call.1} parent=1 // pred_region
      _
    $region13: #{tpu_custom_call.1} parent=1 // pred_fallthru
      _
    // Predicated region
    $region14: #{tpu_custom_call.1} parent=1 // pred_check
      _
    $region15: #{tpu_custom_call.1} parent=1 // pred_check_branch
      %38 = sbr.rel (0) target = $region17
    $region16: #{tpu_custom_call.1} parent=1 // pred_region
      %39 = dma.done [#allocation4], 512
    $region17: #{tpu_custom_call.1} parent=1 // pred_fallthru
      _
    // Predicated region
    $region18: #{tpu_custom_call.1} parent=1 // pred_check
      _
    $region19: #{tpu_custom_call.1} parent=1 // pred_check_branch
      %41 = sbr.rel (0) target = $region21
    $region20: #{tpu_custom_call.1} parent=1 // pred_region
      %42 = dma.done [#allocation7], 1024
    $region21: #{tpu_custom_call.1} parent=1 // pred_fallthru
      _
    %p44 = scmp.eq.s32.totalorder 0, 0
    // Predicated region
    $region22: #{tpu_custom_call.1} parent=1 // pred_check
      %p45 = pneg %p44
    $region23: #{tpu_custom_call.1} parent=1 // pred_check_branch
      %47 = sbr.rel (%p45) target = $region25
    $region24: #{tpu_custom_call.1} parent=1 // pred_region
      %vm48 = vcmask 523264
      %49 = vst.msk [vmem:[#allocation2] sm:$0xff] %vm48, 0.0
      %50 = vst.msk [vmem:[#allocation2 + $0x8] sm:$0xff] %vm48, 0.0
      %51 = vst.msk [vmem:[#allocation2 + $0x10] sm:$0xff] %vm48, 0.0
      %52 = vst.msk [vmem:[#allocation2 + $0x18] sm:$0xff] %vm48, 0.0
    $region25: #{tpu_custom_call.1} parent=1 // pred_fallthru
      _
    %v53 = vld [vmem:[#allocation2] sm:$0xff]
    %v54 = vld [vmem:[#allocation2 + $0x8] sm:$0xff]
    %v55 = vld [vmem:[#allocation2 + $0x10] sm:$0xff]
    %v56 = vld [vmem:[#allocation2 + $0x18] sm:$0xff]
    %v57 = vld [vmem:[#allocation3] sm:$0xff]
    %v58 = vld [vmem:[#allocation3 + $0x8] sm:$0xff]
    %v59 = vld [vmem:[#allocation3 + $0x10] sm:$0xff]
    %v60 = vld [vmem:[#allocation3 + $0x18] sm:$0xff]
    %v61 = vpack.c.bf16 %v58, %v57
    %v62 = vpack.c.bf16 %v60, %v59
    %v63 = vld [vmem:[#allocation6] sm:$0xff]
    %v64 = vld [vmem:[#allocation6 + $0x8] sm:$0xff]
    %v65 = vld [vmem:[#allocation6 + $0x10] sm:$0xff]
    %v66 = vld [vmem:[#allocation6 + $0x18] sm:$0xff]
    %v67 = vld [vmem:[#allocation6 + $0x20] sm:$0xff]
    %v68 = vld [vmem:[#allocation6 + $0x28] sm:$0xff]
    %v69 = vld [vmem:[#allocation6 + $0x30] sm:$0xff]
    %v70 = vld [vmem:[#allocation6 + $0x38] sm:$0xff]
    %v71 = vpack.c.bf16 %v64, %v63
    %v72 = vpack.c.bf16 %v66, %v65
    %v73 = vpack.c.bf16 %v68, %v67
    %v74 = vpack.c.bf16 %v70, %v69
    %vm75 = vcmask 523264
    %v77 = vsel %vm75, %v61, 0
    %v80 = vsel %vm75, %v62, 0
    %v83 = vsel %vm75, %v71, 0
    %v86 = vsel %vm75, %v72, 0
    %v89 = vsel %vm75, %v73, 0
    %v92 = vsel %vm75, %v74, 0
    %94 = vmatprep.subr.bf16.mxu0 0
    %95 = vmatpush1.bf16.xpose.msra.mxu0 %v83
    %96 = vmatprep.subr.bf16.mxu0 0
    %97 = vmatpush1.bf16.xpose.msra.mxu0 %v86
    %98 = vmatprep.subr.bf16.mxu0 0
    %99 = vmatpush1.bf16.xpose.msra.mxu0 %v89
    %100 = vmatprep.subr.bf16.mxu0 0
    %101 = vmatpush1.bf16.xpose.msra.mxu0 %v92
    %102 = vmatprep.subr.bf16.mxu0 0
    %103 = vmatpush1.bf16.xpose.msra.mxu0 0
    %104 = vmatprep.subr.bf16.mxu0 0
    %105 = vmatpush1.bf16.xpose.msra.mxu0 0
    %106 = vmatprep.subr.bf16.mxu0 0
    %107 = vmatpush1.bf16.xpose.msra.mxu0 0
    %108 = vmatprep.subr.bf16.mxu0 0
    %109 = vmatpush1.bf16.xpose.msra.mxu0 0
    %110 = vmatprep.subr.bf16.mxu0 0
    %111 = vmatpush1.bf16.xpose.msra.mxu0 0
    %112 = vmatprep.subr.bf16.mxu0 0
    %113 = vmatpush1.bf16.xpose.msra.mxu0 0
    %114 = vmatprep.subr.bf16.mxu0 0
    %115 = vmatpush1.bf16.xpose.msra.mxu0 0
    %116 = vmatprep.subr.bf16.mxu0 0
    %117 = vmatpush1.bf16.xpose.msra.mxu0 0
    %118 = vmatprep.subr.bf16.mxu0 0
    %119 = vmatpush1.bf16.xpose.msra.mxu0 0
    %120 = vmatprep.subr.bf16.mxu0 0
    %121 = vmatpush1.bf16.xpose.msra.mxu0 0
    %122 = vmatprep.subr.bf16.mxu0 0
    %123 = vmatpush1.bf16.xpose.msra.mxu0 0
    %124 = vmatprep.subr.bf16.mxu0 0
    %125 = vmatpush1.bf16.xpose.msra.mxu0 0
    %126 = vmatprep.mubr.bf16.mxu0 0
    %127 = vmatmul.mubr.bf16.gmra.mrb[0].mxu0 %v77
    %v128 = vpop.f32.mrb[0].mxu0
    %v129 = vadd.f32 0.0, %v128
    %v130 = vpop.f32.mrb[0].mxu0
    %v131 = vpop.f32.mrb[0].mxu0
    %v132 = vadd.f32 0.0, %v131
    %v133 = vpop.f32.mrb[0].mxu0
    %134 = vmatprep.mubr.bf16.mxu0 0
    %135 = vmatmul.mubr.bf16.gmra.mrb[0].mxu0 %v80
    %v136 = vpop.f32.mrb[0].mxu0
    %v137 = vadd.f32 0.0, %v136
    %v138 = vpop.f32.mrb[0].mxu0
    %v139 = vpop.f32.mrb[0].mxu0
    %v140 = vadd.f32 0.0, %v139
    %v141 = vpop.f32.mrb[0].mxu0
    %142 = vdwg.mxu0
    %v143 = vadd.f32 %v53, %v129
    %v144 = vadd.f32 %v54, %v132
    %v145 = vadd.f32 %v55, %v137
    %v146 = vadd.f32 %v56, %v140
    %147 = vst.msk [vmem:[#allocation2] sm:$0xff] %vm75, %v143
    %148 = vst.msk [vmem:[#allocation2 + $0x8] sm:$0xff] %vm75, %v144
    %149 = vst.msk [vmem:[#allocation2 + $0x10] sm:$0xff] %vm75, %v145
    %150 = vst.msk [vmem:[#allocation2 + $0x18] sm:$0xff] %vm75, %v146
    // Predicated region
    $region26: #{tpu_custom_call.1} parent=1 // pred_check
      %p151 = pneg %p44
    $region27: #{tpu_custom_call.1} parent=1 // pred_check_branch
      %153 = sbr.rel (%p151) target = $region29
    $region28: #{tpu_custom_call.1} parent=1 // pred_region
      %v154 = vld [vmem:[#allocation2] sm:$0xff]
      %v155 = vld [vmem:[#allocation2 + $0x8] sm:$0xff]
      %v156 = vld [vmem:[#allocation2 + $0x10] sm:$0xff]
      %v157 = vld [vmem:[#allocation2 + $0x18] sm:$0xff]
      %v158 = vld [vmem:[%s2] sm:$0x1]
      %v160 = vlaneseq
      %v161 = vshrl.u32 %v160, 7
      %v162 = vsub.s32 0, %v161
      %v163 = vrot.slane %v158, %v162
      %v165 = vadd.f32 %v154, %v163
      %v166 = vadd.f32 %v155, %v163
      %v167 = vadd.f32 %v156, %v163
      %v168 = vadd.f32 %v157, %v163
      %169 = vst.msk [vmem:[#allocation8] sm:$0xff] %vm75, %v165
      %170 = vst.msk [vmem:[#allocation8 + $0x8] sm:$0xff] %vm75, %v166
      %171 = vst.msk [vmem:[#allocation8 + $0x10] sm:$0xff] %vm75, %v167
      %172 = vst.msk [vmem:[#allocation8 + $0x18] sm:$0xff] %vm75, %v168
    $region29: #{tpu_custom_call.1} parent=1 // pred_fallthru
      _
    // Predicated region
    $region30: #{tpu_custom_call.1} parent=1 // pred_check
      _
    $region31: #{tpu_custom_call.1} parent=1 // pred_check_branch
      %174 = sbr.rel (0) target = $region33
    $region32: #{tpu_custom_call.1} parent=1 // pred_region
      %s176 = ssub.s32 512, 512
      %177 = vsyncadd [#allocation5], %s176
      %s178 = sshll.u32 [#allocation8], 4
      %s179 = int_to_ptr.vmem [resolvable:$true] %s178
      %184 = dma.vmem_to_hbm [thread:$0]  %s179, 512, %s3, [#allocation5], 128, 128, 8
    $region33: #{tpu_custom_call.1} parent=1 // pred_fallthru
      _
    // Predicated region
    $region34: #{tpu_custom_call.1} parent=1 // pred_check
      _
    $region35: #{tpu_custom_call.1} parent=1 // pred_check_branch
      %186 = sbr.rel (0) target = $region37
    $region36: #{tpu_custom_call.1} parent=1 // pred_region
      %187 = dma.done [#allocation5], 512
    $region37: #{tpu_custom_call.1} parent=1 // pred_fallthru
      _
    %188 = vsyncpa [#allocation4], 1
    %189 = vsyncpa [#allocation7], 1
    %190 = vsyncpa [#allocation5], 1

</llo_original>
